<compile_context>
chip_gen: v6e
topology: v6e:2x2x1
jax: 0.10.0
libtpu: 0.0.40
codegen_flags: <defaults>
</compile_context>

<pallas_src>
import jax
import jax.numpy as jnp
import numpy as np
from jax import lax
from jax.experimental import pallas as pl
from jax.experimental.pallas import tpu as pltpu


def _make_freqrise_kernel(use_softmax):
    def kernel(keep_ref, u_ref, a_hi_ref, a_lo_ref, b_ref, acc_ref):
        # Output block is resident across the last ("arbitrary") grid axis.
        @pl.when(pl.program_id(1) == 0)
        def _init():
            acc_ref[...] = jnp.zeros_like(acc_ref)

        # 1) Mask synthesis on the MXU: coarse {0,1} keep grid -> linear upsample.
        #    keep (Bt, C*NC) bf16  @  U (C*NC, C*Fp) bf16 block-diag  -> (Bt, C*Fp)
        #    Products are exact in the f32 accumulator (keep is 0/1, <=2 nonzero
        #    terms per output), so the bf16 cast below matches the host reference
        #    masks bit-for-bit.
        m = jnp.dot(keep_ref[...], u_ref[...],
                    preferred_element_type=jnp.float32).astype(jnp.bfloat16)

        # 2) Encoder logits: (fft * mask) -> irfft -> linear encoder, all fused on
        #    the host into one (C*Fp, K) basis, fed as bf16 hi/lo halves so both
        #    matmuls take the native bf16 MXU path while keeping ~f32 accuracy.
        logits = (jnp.dot(m, a_hi_ref[...], preferred_element_type=jnp.float32)
                  + jnp.dot(m, a_lo_ref[...], preferred_element_type=jnp.float32)
                  + b_ref[...])                                     # (Bt, K)

        if use_softmax:
            mx = jnp.max(logits, axis=-1, keepdims=True)
            e = jnp.exp(logits - mx)
            logits = e * pl.reciprocal(jnp.sum(e, axis=-1, keepdims=True),
                                       approx=True)

        # 3) Saliency: acc[k, cf] += sum_b logits[b, k] * m[b, cf]   (bf16 MXU)
        acc_ref[...] += lax.dot_general(
            logits.astype(jnp.bfloat16), m,
            dimension_numbers=(((0,), (0,)), ((), ())),
            preferred_element_type=jnp.float32)                     # (K, C*Fp)

    return kernel


def freqrise_saliency(input_data, target_class, probability_of_drop, num_cells,
                      batch_size, num_batches, W, b, mask_key,
                      use_softmax=False, num_parallel=1, batches_per_step=1):
    """Pallas implementation of FreqRISE.forward. Returns (importance, masks).

    num_parallel: keep 1 on single-TC v5e/v6e; 2 shards the grid across v7x TCs.
    batches_per_step: folds several mask batches into one grid step (bigger tiles).
    """
    C, T = input_data.shape
    assert T % 2 == 0, "even signal length assumed (Nyquist bin handling)"
    F = T // 2 + 1
    F_pad = pl.cdiv(F, 128) * 128          # lane-dense last dim
    pad = F_pad - F
    K = W.shape[-1]
    B, N = batch_size, num_batches
    NC = num_cells
    P = num_parallel if N % num_parallel == 0 else 1
    bps = batches_per_step if (N // P) % batches_per_step == 0 else 1
    S = N // (P * bps)                     # accumulation steps per parallel slice
    Bt = B * bps                           # mask rows per grid step
    CF = C * F_pad
    CNC = C * NC

    hp = lax.Precision.HIGHEST             # host-side precompute in full f32

    # ---- coarse keep grid + linear interpolation matrix -------------------------
    keep = (jax.random.uniform(mask_key, (N, C, B, NC))
            > probability_of_drop).astype(jnp.float32)             # {0,1}
    pos = jnp.linspace(0.0, NC - 1.0, F)
    lo = jnp.floor(pos).astype(jnp.int32)
    hi = jnp.clip(lo + 1, 0, NC - 1)
    frac = pos - lo.astype(jnp.float32)
    U = (jax.nn.one_hot(lo, NC, dtype=jnp.float32).T * (1.0 - frac)
         + jax.nn.one_hot(hi, NC, dtype=jnp.float32).T * frac)      # (NC, F)
    U = U.astype(jnp.bfloat16).astype(jnp.float32)                  # bf16-rounded weights
    U_pad = jnp.pad(U, ((0, 0), (0, pad)))                          # (NC, F_pad)
    U_block = jnp.kron(jnp.eye(C, dtype=jnp.float32),
                       U_pad).astype(jnp.bfloat16)                  # (C*NC, C*F_pad)

    # Full-resolution masks are materialized ONLY for the reference check below;
    # the kernel never streams them (it rebuilds them from `keep` on the MXU).
    masks = jnp.einsum('ncbg,gf->ncbf', keep, U,
                       precision=hp).astype(jnp.bfloat16)           # (N, C, B, F)

    # ---- fused basis: rfft(input) * irfft synthesis * linear encoder ------------
    fft = jnp.fft.rfft(input_data.astype(jnp.float32), axis=-1)     # (C, F)
    fidx = jnp.arange(F, dtype=jnp.float32)[:, None]
    tidx = jnp.arange(T, dtype=jnp.float32)[None, :]
    ang = 2.0 * jnp.pi * fidx * tidx / T
    cf = jnp.where((jnp.arange(F) == 0) | (jnp.arange(F) == F - 1), 1.0, 2.0)
    cosW = jnp.cos(ang) * cf[:, None] / T                           # (F, T)
    sinW = -jnp.sin(ang) * cf[:, None] / T                          # (F, T)
    W32 = W.astype(jnp.float32)
    A = jnp.einsum('ft,ctk->cfk', cosW, W32, precision=hp)          # (C, F, K)
    Sb = jnp.einsum('ft,ctk->cfk', sinW, W32, precision=hp)         # (C, F, K)
    Af = jnp.real(fft)[..., None] * A + jnp.imag(fft)[..., None] * Sb
    Af = jnp.pad(Af, ((0, 0), (0, pad), (0, 0))).reshape(CF, K)     # (C*F_pad, K) f32
    a_hi = Af.astype(jnp.bfloat16)                                  # bf16 hi/lo split
    a_lo = (Af - a_hi.astype(jnp.float32)).astype(jnp.bfloat16)

    # ---- keep grid in kernel layout: (P, S, Bt, C*NC), bf16 ----------------------
    keep_k = jnp.transpose(keep, (0, 2, 1, 3)).reshape(N, B, CNC)
    keep_k = keep_k.reshape(P, S, Bt, CNC).astype(jnp.bfloat16)

    kernel = _make_freqrise_kernel(use_softmax)

    acc = pl.pallas_call(
        kernel,
        out_shape=jax.ShapeDtypeStruct((P, K, CF), jnp.float32),
        grid=(P, S),
        in_specs=[
            # streamed per-step coarse keep grid (only HBM-streamed tensor)
            pl.BlockSpec((None, None, Bt, CNC), lambda p, s: (p, s, 0, 0)),
            # resident constants (tiny): interpolation matrix, fused basis, bias
            pl.BlockSpec((CNC, CF), lambda p, s: (0, 0)),
            pl.BlockSpec((CF, K), lambda p, s: (0, 0)),
            pl.BlockSpec((CF, K), lambda p, s: (0, 0)),
            pl.BlockSpec((1, K), lambda p, s: (0, 0)),
        ],
        out_specs=pl.BlockSpec((None, K, CF), lambda p, s: (p, 0, 0)),
        compiler_params=pltpu.CompilerParams(
            dimension_semantics=("parallel", "arbitrary"),
            # 48 MiB is safe on v5e/v6e (128 MiB) and v7x (64 MiB physical);
            # raise toward ~96 MiB on v5e/v6e if Bt is scaled up further.
            vmem_limit_bytes=48 * 1024 * 1024),
    )(keep_k, U_block, a_hi, a_lo, b.astype(jnp.float32).reshape(1, K))

    # ---- combine parallel partials, average, pick class, normalize --------------
    sal = jnp.sum(acc, axis=0).reshape(K, C, F_pad)[:, :, :F]       # (K, C, F)
    importance = jnp.transpose(sal, (1, 2, 0)).reshape(C * F, K) / (N * B)
    imp = importance[:, target_class] / probability_of_drop
    rng = jnp.maximum(imp.max() - imp.min(), 1e-12)                 # NaN guard
    imp = (imp - imp.min()) / rng

    return imp, masks.astype(jnp.float32)                           # (N, C, B, F)


def reference_freqrise(input_data, target_class, probability_of_drop, masks, W, b,
                       use_softmax=False):
    """Pure-JAX reference mirroring the PyTorch forward (uses real FFT routines).

    masks: (N, C, B, F) float32 — the exact mask values applied by the kernel.
    """
    hp = lax.Precision.HIGHEST
    N, C, B, F = masks.shape
    T = input_data.shape[-1]
    K = W.shape[-1]
    fft = jnp.fft.rfft(input_data.astype(jnp.float32), axis=-1)     # (C, F)
    xm = fft[None, :, None, :] * masks.astype(jnp.complex64)        # (N, C, B, F)
    xt = jnp.fft.irfft(xm, n=T, axis=-1)                            # (N, C, B, T)
    xt = jnp.transpose(xt, (0, 2, 1, 3)).reshape(N * B, C * T)
    logits = jnp.einsum('bi,ik->bk', xt, W.reshape(C * T, K),
                        precision=hp) + b.reshape(1, K)
    if use_softmax:
        logits = jax.nn.softmax(logits, axis=-1)
    mabs = jnp.abs(jnp.transpose(masks, (0, 2, 1, 3)).reshape(N * B, C * F))
    sal = jnp.einsum('bk,bf->kf', logits, mabs, precision=hp)       # (K, C*F)
    importance = sal.T / (N * B)                                    # (C*F, K)
    imp = importance[:, target_class] / probability_of_drop
    rng = jnp.maximum(imp.max() - imp.min(), 1e-12)
    return (imp - imp.min()) / rng


if __name__ == "__main__":
    key = jax.random.PRNGKey(0)
    k_sig, k_w, k_b, k_mask = jax.random.split(key, 4)

    # small, forward-consistent shapes: grid = (P=1 parallel, S=2 accumulation
    # steps), each step processes 256 mask rows synthesized from a (256, 32)
    # coarse keep grid.
    C, T = 2, 128          # input signal: channels x time
    K = 8                  # number of classes
    batch_size = 128       # masks per original batch
    num_batches = 4        # total mask batches
    num_cells = 16         # coarse mask grid
    probability_of_drop = 0.5
    target_class = 3

    input_data = jax.random.normal(k_sig, (C, T), dtype=jnp.float32)
    # deterministic synthetic linear encoder: (C, T, K) weights + (K,) bias
    W = jax.random.normal(k_w, (C, T, K), dtype=jnp.float32) * 0.05
    b = jax.random.normal(k_b, (K,), dtype=jnp.float32) * 0.01

    imp, masks = freqrise_saliency(
        input_data, target_class, probability_of_drop, num_cells,
        batch_size, num_batches, W, b, k_mask,
        use_softmax=False, num_parallel=1, batches_per_step=2)
    imp = jax.block_until_ready(imp)

    ref = reference_freqrise(input_data, target_class, probability_of_drop,
                             masks, W, b, use_softmax=False)
    np.testing.assert_allclose(np.asarray(imp), np.asarray(ref), rtol=2e-2, atol=2e-2)
    print("KERNEL_OK")
</pallas_src>

<mosaic_0001>
module attributes {stable_mosaic.version = 11 : i64} {
  func.func @kernel(%arg0: i32, %arg1: i32, %arg2: memref<1x1x256x32xbf16, #tpu.memory_space<vmem>>, %arg3: memref<32x256xbf16, #tpu.memory_space<vmem>>, %arg4: memref<256x8xbf16, #tpu.memory_space<vmem>>, %arg5: memref<256x8xbf16, #tpu.memory_space<vmem>>, %arg6: memref<1x8xf32, #tpu.memory_space<vmem>>, %arg7: memref<1x8x256xf32, #tpu.memory_space<vmem>>) attributes {dimension_semantics = [#tpu.dimension_semantics<parallel>, #tpu.dimension_semantics<arbitrary>], iteration_bounds = array<i64: 1, 2>, scalar_prefetch = 0 : i64, scratch_operands = 0 : i64, tpu.core_type = #tpu.core_type<tc>, window_params = [{transform_indices = @transform_0, window_bounds = array<i64: 1, 1, 256, 32>}, {pipeline_mode = #tpu.pipeline_mode<synchronous>, transform_indices = @transform_1, window_bounds = array<i64: 32, 256>}, {pipeline_mode = #tpu.pipeline_mode<synchronous>, transform_indices = @transform_2, window_bounds = array<i64: 256, 8>}, {pipeline_mode = #tpu.pipeline_mode<synchronous>, transform_indices = @transform_3, window_bounds = array<i64: 256, 8>}, {pipeline_mode = #tpu.pipeline_mode<synchronous>, transform_indices = @transform_4, window_bounds = array<i64: 1, 8>}, {transform_indices = @transform_5, window_bounds = array<i64: 1, 8, 256>}]} {
    %c0_i32 = arith.constant 0 : i32
    %0 = arith.cmpi eq, %arg1, %c0_i32 : i32
    %1 = arith.extui %0 : i1 to i32
    %c0_i32_0 = arith.constant 0 : i32
    %2 = arith.cmpi ne, %1, %c0_i32_0 : i32
    scf.if %2 {
      %cst_21 = arith.constant 0.000000e+00 : f32
      %24 = vector.broadcast %cst_21 : f32 to vector<8x256xf32>
      %c0_22 = arith.constant 0 : index
      %c0_23 = arith.constant 0 : index
      %c0_24 = arith.constant 0 : index
      %25 = vector.load %arg7[%c0_22, %c0_23, %c0_24] : memref<1x8x256xf32, #tpu.memory_space<vmem>>, vector<1x8x256xf32>
      %26 = vector.shape_cast %25 : vector<1x8x256xf32> to vector<8x256xf32>
      %27 = vector.shape_cast %24 : vector<8x256xf32> to vector<1x8x256xf32>
      tpu.vector_store %arg7[%c0_22, %c0_23, %c0_24], %27 {strides = array<i32>} : memref<1x8x256xf32, #tpu.memory_space<vmem>>, vector<1x8x256xf32>,
    } else {
    }
    %c0 = arith.constant 0 : index
    %c0_1 = arith.constant 0 : index
    %c0_2 = arith.constant 0 : index
    %c0_3 = arith.constant 0 : index
    %3 = vector.load %arg2[%c0, %c0_1, %c0_2, %c0_3] : memref<1x1x256x32xbf16, #tpu.memory_space<vmem>>, vector<1x1x256x32xbf16>
    %4 = vector.shape_cast %3 : vector<1x1x256x32xbf16> to vector<256x32xbf16>
    %c0_4 = arith.constant 0 : index
    %c0_5 = arith.constant 0 : index
    %5 = vector.load %arg3[%c0_4, %c0_5] : memref<32x256xbf16, #tpu.memory_space<vmem>>, vector<32x256xbf16>
    %cst = arith.constant dense<0.000000e+00> : vector<256x256xf32>
    %6 = tpu.matmul %4, %5, %cst {dimension_numbers = #tpu.dot_dimension_numbers<[1], [0], [0], [1], [0, 0, 1, 1], [], []>} : vector<256x32xbf16>, vector<32x256xbf16>, vector<256x256xf32> -> vector<256x256xf32>
    %7 = arith.truncf %6 : vector<256x256xf32> to vector<256x256xbf16>
    %c0_6 = arith.constant 0 : index
    %c0_7 = arith.constant 0 : index
    %8 = vector.load %arg4[%c0_6, %c0_7] : memref<256x8xbf16, #tpu.memory_space<vmem>>, vector<256x8xbf16>
    %cst_8 = arith.constant dense<0.000000e+00> : vector<256x8xf32>
    %9 = tpu.matmul %7, %8, %cst_8 {dimension_numbers = #tpu.dot_dimension_numbers<[1], [0], [0], [1], [0, 0, 1, 1], [], []>} : vector<256x256xbf16>, vector<256x8xbf16>, vector<256x8xf32> -> vector<256x8xf32>
    %c0_9 = arith.constant 0 : index
    %c0_10 = arith.constant 0 : index
    %10 = vector.load %arg5[%c0_9, %c0_10] : memref<256x8xbf16, #tpu.memory_space<vmem>>, vector<256x8xbf16>
    %cst_11 = arith.constant dense<0.000000e+00> : vector<256x8xf32>
    %11 = tpu.matmul %7, %10, %cst_11 {dimension_numbers = #tpu.dot_dimension_numbers<[1], [0], [0], [1], [0, 0, 1, 1], [], []>} : vector<256x256xbf16>, vector<256x8xbf16>, vector<256x8xf32> -> vector<256x8xf32>
    %12 = arith.addf %9, %11 : vector<256x8xf32>
    %c0_12 = arith.constant 0 : index
    %c0_13 = arith.constant 0 : index
    %13 = vector.load %arg6[%c0_12, %c0_13] : memref<1x8xf32, #tpu.memory_space<vmem>>, vector<1x8xf32>
    %14 = vector.broadcast %13 : vector<1x8xf32> to vector<256x8xf32>
    %15 = arith.addf %12, %14 : vector<256x8xf32>
    %c0_14 = arith.constant 0 : index
    %c0_15 = arith.constant 0 : index
    %c0_16 = arith.constant 0 : index
    %16 = vector.load %arg7[%c0_14, %c0_15, %c0_16] : memref<1x8x256xf32, #tpu.memory_space<vmem>>, vector<1x8x256xf32>
    %17 = vector.shape_cast %16 : vector<1x8x256xf32> to vector<8x256xf32>
    %18 = arith.truncf %15 : vector<256x8xf32> to vector<256x8xbf16>
    %cst_17 = arith.constant dense<0.000000e+00> : vector<8x256xf32>
    %19 = tpu.matmul %18, %7, %cst_17 {dimension_numbers = #tpu.dot_dimension_numbers<[0], [0], [1], [1], [0, 1, 1, 1], [], []>} : vector<256x8xbf16>, vector<256x256xbf16>, vector<8x256xf32> -> vector<8x256xf32>
    %20 = arith.addf %17, %19 : vector<8x256xf32>
    %c0_18 = arith.constant 0 : index
    %c0_19 = arith.constant 0 : index
    %c0_20 = arith.constant 0 : index
    %21 = vector.load %arg7[%c0_18, %c0_19, %c0_20] : memref<1x8x256xf32, #tpu.memory_space<vmem>>, vector<1x8x256xf32>
    %22 = vector.shape_cast %21 : vector<1x8x256xf32> to vector<8x256xf32>
    %23 = vector.shape_cast %20 : vector<8x256xf32> to vector<1x8x256xf32>
    tpu.vector_store %arg7[%c0_18, %c0_19, %c0_20], %23 {strides = array<i32>} : memref<1x8x256xf32, #tpu.memory_space<vmem>>, vector<1x8x256xf32>,
    return
  }
  func.func @transform_0(%arg0: i32, %arg1: i32) -> (i32, i32, i32, i32) {
    %c0_i32 = arith.constant 0 : i32
    %c0_i32_0 = arith.constant 0 : i32
    %c0_i32_1 = arith.constant 0 : i32
    return %arg0, %arg1, %c0_i32, %c0_i32_0 : i32, i32, i32, i32
  }
  func.func @transform_1(%arg0: i32, %arg1: i32) -> (i32, i32) {
    %c0_i32 = arith.constant 0 : i32
    %c0_i32_0 = arith.constant 0 : i32
    %c0_i32_1 = arith.constant 0 : i32
    return %c0_i32, %c0_i32_0 : i32, i32
  }
  func.func @transform_2(%arg0: i32, %arg1: i32) -> (i32, i32) {
    %c0_i32 = arith.constant 0 : i32
    %c0_i32_0 = arith.constant 0 : i32
    %c0_i32_1 = arith.constant 0 : i32
    return %c0_i32, %c0_i32_0 : i32, i32
  }
  func.func @transform_3(%arg0: i32, %arg1: i32) -> (i32, i32) {
    %c0_i32 = arith.constant 0 : i32
    %c0_i32_0 = arith.constant 0 : i32
    %c0_i32_1 = arith.constant 0 : i32
    return %c0_i32, %c0_i32_0 : i32, i32
  }
  func.func @transform_4(%arg0: i32, %arg1: i32) -> (i32, i32) {
    %c0_i32 = arith.constant 0 : i32
    %c0_i32_0 = arith.constant 0 : i32
    %c0_i32_1 = arith.constant 0 : i32
    return %c0_i32, %c0_i32_0 : i32, i32
  }
  func.func @transform_5(%arg0: i32, %arg1: i32) -> (i32, i32, i32) {
    %c0_i32 = arith.constant 0 : i32
    %c0_i32_0 = arith.constant 0 : i32
    %c0_i32_1 = arith.constant 0 : i32
    return %arg0, %c0_i32, %c0_i32_0 : i32, i32, i32
  }
}

</mosaic_0001>

<llo_original>
// kernel: tpu_custom_call.1
$region0: #{tpu_custom_call.1}
  #allocation0 [shape = 'u32[]', space=smem, size = 0x4, offset = 0x4, fixed_abs, tag = 'smem constant byte address 0x4 - core index']
  #allocation1 [shape = 'u32[144,128]{1,0:T(1,128)}', space=vmem, size = 0x12000, scoped, tag = 'internal scratch']
  %s0 = inlined_call_operand.vmem [shape: bf16[1,2,256,32], index: 0, kind: input, shape index: {}]
  %s1 = inlined_call_operand.vmem [shape: bf16[32,256], index: 1, kind: input, shape index: {}]
  %s2 = inlined_call_operand.vmem [shape: bf16[256,8], index: 2, kind: input, shape index: {}]
  %s3 = inlined_call_operand.vmem [shape: bf16[256,8], index: 3, kind: input, shape index: {}]
  %s4 = inlined_call_operand.vmem [shape: f32[1,8], index: 4, kind: input, shape index: {}]
  %s5 = inlined_call_operand.hbm [shape: f32[1,8,256], index: 5, kind: output, shape index: {}]
  %s6 = sld [smem:[#allocation0]]
  $region57: #{tpu_custom_call.1} parent=0
    _
  %s8 = ssub.s32 1, %s6
  %s9 = scalar_select 0, %s8, %s6
  $region1: #{tpu_custom_call.1} parent=0
    #allocation2 [shape = 'u8[8192]{0}', space=vmem, size = 0x2000, scoped, tag = 'output window, operand 0, single buffered']
    #allocation3 [shape = 's32[2]{0}', space=sflag, size = 0x8, scoped, tag = 'scoped memory for tpu_custom_call.1']
    %10 = vsyncpa [#allocation3], 0
    loop: start=0, step=1, limit=4
    $region2: #{tpu_custom_call.1} parent=1 // loop_pre_header
      _
    $region3: #{tpu_custom_call.1} parent=1 // loop_header
      %s12 = sphi 0, %s16
      %p13 = scmp.ge.s32.totalorder %s12, 4
      %s19 = sphi 0, %s31
      %s20 = sphi 0, %s27
      %s21 = sphi 0, %s19
      %s22 = sphi 0, %s20
      %s23 = sphi 0, %s21
      %s24 = sphi 0, %s22
      %s36 = sphi 0, %s38
      %s39 = sphi 0, %s36
      %s40 = sphi 0, %s39
      %s56 = sphi 0, %s40
      %s60 = sphi 0, %s60
      %s62 = sphi 0, %s60
      %s63 = sphi 0, %s62
      %s77 = sphi 0, %s63
      %s81 = sphi 0, %s81
      %s83 = sphi 0, %s81
      %s84 = sphi 0, %s83
      %s98 = sphi 0, %s84
      %s102 = sphi 0, %s102
      %s104 = sphi 0, %s102
      %s105 = sphi 0, %s104
      %s119 = sphi 0, %s105
      %s123 = sphi 0, %s123
      %s125 = sphi 0, %s123
      %s126 = sphi 0, %s125
      %s140 = sphi 0, %s126
      %s146 = sphi 0, %s148
      %s149 = sphi 0, %s146
      %s150 = sphi 0, %s149
      %s166 = sphi 0, %s150
    $region4: #{tpu_custom_call.1} parent=1 // loop_header_branch
      %15 = sbr.rel (%p13) target = $region8
    $region5: #{tpu_custom_call.1} parent=1 // loop_body
      %s17 = ssub.s32 %s12, 1
      %s18 = ssub.s32 %s12, 2
      %s25 = sadd.s32 1, %s20
      %p26 = scmp.ge.s32.totalorder %s25, 2
      %s27 = scalar_select %p26, 0, %s25
      %s28 = sadd.s32 1, %s19
      %s29 = scalar_select %p26, %s28, %s19
      %p30 = scmp.ge.s32.totalorder %s29, 1
      %s31 = scalar_select %p30, 0, %s29
      %s32 = ssub.s32 %s19, %s31
      %s33 = ssub.s32 %s20, %s27
      %s34 = sor.u32 %s32, %s33
      %p35 = scmp.eq.s32.totalorder %s34, 0
      %s37 = sadd.s32 %s36, 1
      %s38 = scalar_select %p35, %s36, %s37
      %p41 = pneg %p35
      %p42 = scmp.eq.s32.totalorder %s12, 1
      %p43 = por %p41, %p42
      %p44 = scmp.ne.s32.totalorder %s36, %s39
      %p45 = scmp.eq.s32.totalorder %s12, 0
      %p46 = por %p44, %p45
      %p47 = scmp.ne.s32.totalorder %s36, %s39
      %p48 = scmp.eq.s32.totalorder %s17, 1
      %p49 = por %p47, %p48
      %p50 = scmp.ne.s32.totalorder %s39, %s40
      %p51 = scmp.eq.s32.totalorder %s17, 0
      %p52 = por %p50, %p51
      %p53 = scmp.ne.s32.totalorder %s39, %s40
      %p54 = scmp.eq.s32.totalorder %s18, 1
      %p55 = por %p53, %p54
      %p57 = scmp.ne.s32.totalorder %s40, %s56
      %p58 = scmp.eq.s32.totalorder %s18, 0
      %p59 = por %p57, %p58
      %s61 = sadd.s32 %s60, 1
      %p64 = scmp.eq.s32.totalorder %s12, 1
      %p65 = scmp.ne.s32.totalorder %s60, %s62
      %p66 = scmp.eq.s32.totalorder %s12, 0
      %p67 = por %p65, %p66
      %p68 = scmp.ne.s32.totalorder %s60, %s62
      %p69 = scmp.eq.s32.totalorder %s17, 1
      %p70 = por %p68, %p69
      %p71 = scmp.ne.s32.totalorder %s62, %s63
      %p72 = scmp.eq.s32.totalorder %s17, 0
      %p73 = por %p71, %p72
      %p74 = scmp.ne.s32.totalorder %s62, %s63
      %p75 = scmp.eq.s32.totalorder %s18, 1
      %p76 = por %p74, %p75
      %p78 = scmp.ne.s32.totalorder %s63, %s77
      %p79 = scmp.eq.s32.totalorder %s18, 0
      %p80 = por %p78, %p79
      %s82 = sadd.s32 %s81, 1
      %p85 = scmp.eq.s32.totalorder %s12, 1
      %p86 = scmp.ne.s32.totalorder %s81, %s83
      %p87 = scmp.eq.s32.totalorder %s12, 0
      %p88 = por %p86, %p87
      %p89 = scmp.ne.s32.totalorder %s81, %s83
      %p90 = scmp.eq.s32.totalorder %s17, 1
      %p91 = por %p89, %p90
      %p92 = scmp.ne.s32.totalorder %s83, %s84
      %p93 = scmp.eq.s32.totalorder %s17, 0
      %p94 = por %p92, %p93
      %p95 = scmp.ne.s32.totalorder %s83, %s84
      %p96 = scmp.eq.s32.totalorder %s18, 1
      %p97 = por %p95, %p96
      %p99 = scmp.ne.s32.totalorder %s84, %s98
      %p100 = scmp.eq.s32.totalorder %s18, 0
      %p101 = por %p99, %p100
      %s103 = sadd.s32 %s102, 1
      %p106 = scmp.eq.s32.totalorder %s12, 1
      %p107 = scmp.ne.s32.totalorder %s102, %s104
      %p108 = scmp.eq.s32.totalorder %s12, 0
      %p109 = por %p107, %p108
      %p110 = scmp.ne.s32.totalorder %s102, %s104
      %p111 = scmp.eq.s32.totalorder %s17, 1
      %p112 = por %p110, %p111
      %p113 = scmp.ne.s32.totalorder %s104, %s105
      %p114 = scmp.eq.s32.totalorder %s17, 0
      %p115 = por %p113, %p114
      %p116 = scmp.ne.s32.totalorder %s104, %s105
      %p117 = scmp.eq.s32.totalorder %s18, 1
      %p118 = por %p116, %p117
      %p120 = scmp.ne.s32.totalorder %s105, %s119
      %p121 = scmp.eq.s32.totalorder %s18, 0
      %p122 = por %p120, %p121
      %s124 = sadd.s32 %s123, 1
      %p127 = scmp.eq.s32.totalorder %s12, 1
      %p128 = scmp.ne.s32.totalorder %s123, %s125
      %p129 = scmp.eq.s32.totalorder %s12, 0
      %p130 = por %p128, %p129
      %p131 = scmp.ne.s32.totalorder %s123, %s125
      %p132 = scmp.eq.s32.totalorder %s17, 1
      %p133 = por %p131, %p132
      %p134 = scmp.ne.s32.totalorder %s125, %s126
      %p135 = scmp.eq.s32.totalorder %s17, 0
      %p136 = por %p134, %p135
      %p137 = scmp.ne.s32.totalorder %s125, %s126
      %p138 = scmp.eq.s32.totalorder %s18, 1
      %p139 = por %p137, %p138
      %p141 = scmp.ne.s32.totalorder %s126, %s140
      %p142 = scmp.eq.s32.totalorder %s18, 0
      %p143 = por %p141, %p142
      %s144 = ssub.s32 %s19, %s31
      %p145 = scmp.eq.s32.totalorder %s144, 0
      %s147 = sadd.s32 %s146, 1
      %s148 = scalar_select %p145, %s146, %s147
      %p151 = pneg %p145
      %p152 = scmp.eq.s32.totalorder %s12, 1
      %p153 = por %p151, %p152
      %p154 = scmp.ne.s32.totalorder %s146, %s149
      %p155 = scmp.eq.s32.totalorder %s12, 0
      %p156 = por %p154, %p155
      %p157 = scmp.ne.s32.totalorder %s146, %s149
      %p158 = scmp.eq.s32.totalorder %s17, 1
      %p159 = por %p157, %p158
      %p160 = scmp.ne.s32.totalorder %s149, %s150
      %p161 = scmp.eq.s32.totalorder %s17, 0
      %p162 = por %p160, %p161
      %p163 = scmp.ne.s32.totalorder %s149, %s150
      %p164 = scmp.eq.s32.totalorder %s18, 1
      %p165 = por %p163, %p164
      %p167 = scmp.ne.s32.totalorder %s150, %s166
      %p168 = scmp.eq.s32.totalorder %s18, 0
      %p169 = por %p167, %p168
      %p170 = scmp.le.s32.totalorder 1, %s12
      %p171 = scmp.lt.s32.totalorder %s12, 3
      %p172 = pnand %p170, %p171
      %p173 = pneg %p172
      // Predicated region
      $region9: #{tpu_custom_call.1} parent=5 // pred_check
        _
      $region10: #{tpu_custom_call.1} parent=5 // pred_check_branch
        %175 = sbr.rel (%p172) target = $region12
      $region11: #{tpu_custom_call.1} parent=5 // pred_region
        %s176 = ssub.s32 %s12, 1
        // Predicated region
        $region13: #{tpu_custom_call.1} parent=11 // pred_check
          %p177 = pneg %p73
        $region14: #{tpu_custom_call.1} parent=11 // pred_check_branch
          %179 = sbr.rel (%p177) target = $region16
        $region15: #{tpu_custom_call.1} parent=11 // pred_region
          _
        $region16: #{tpu_custom_call.1} parent=11 // pred_fallthru
          _
        // Predicated region
        $region17: #{tpu_custom_call.1} parent=11 // pred_check
          %p180 = pneg %p94
        $region18: #{tpu_custom_call.1} parent=11 // pred_check_branch
          %182 = sbr.rel (%p180) target = $region20
        $region19: #{tpu_custom_call.1} parent=11 // pred_region
          _
        $region20: #{tpu_custom_call.1} parent=11 // pred_fallthru
          _
        // Predicated region
        $region21: #{tpu_custom_call.1} parent=11 // pred_check
          %p183 = pneg %p115
        $region22: #{tpu_custom_call.1} parent=11 // pred_check_branch
          %185 = sbr.rel (%p183) target = $region24
        $region23: #{tpu_custom_call.1} parent=11 // pred_region
          _
        $region24: #{tpu_custom_call.1} parent=11 // pred_fallthru
          _
        // Predicated region
        $region25: #{tpu_custom_call.1} parent=11 // pred_check
          %p186 = pneg %p136
        $region26: #{tpu_custom_call.1} parent=11 // pred_check_branch
          %188 = sbr.rel (%p186) target = $region28
        $region27: #{tpu_custom_call.1} parent=11 // pred_region
          _
        $region28: #{tpu_custom_call.1} parent=11 // pred_fallthru
          _
      $region12: #{tpu_custom_call.1} parent=5 // pred_fallthru
        _
      %p189 = scmp.lt.s32.totalorder %s12, 2
      // Predicated region
      $region29: #{tpu_custom_call.1} parent=5 // pred_check
        %p190 = pneg %p189
      $region30: #{tpu_custom_call.1} parent=5 // pred_check_branch
        %192 = sbr.rel (%p190) target = $region32
      $region31: #{tpu_custom_call.1} parent=5 // pred_region
        // Predicated region
        $region33: #{tpu_custom_call.1} parent=31 // pred_check
          %p193 = pneg %p46
        $region34: #{tpu_custom_call.1} parent=31 // pred_check_branch
          %195 = sbr.rel (%p193) target = $region36
        $region35: #{tpu_custom_call.1} parent=31 // pred_region
          %p196 = scmp.lt.s32.totalorder %s19, 0
          %s197 = scalar_select %p196, %s19, 0
          %p198 = scmp.lt.s32.totalorder %s20, 1
          %s199 = scalar_select %p198, %s20, 1
          %s200 = smul.addr %s199, 32
          %s201 = smul.addr %s197, 64
          %s202 = sadd.s32 %s200, %s201
          %s203 = smul.addr %s202, 4
          %s204 = scalar_lea.vmem %s0, %s203
        $region36: #{tpu_custom_call.1} parent=31 // pred_fallthru
          _
      $region32: #{tpu_custom_call.1} parent=5 // pred_fallthru
        _
      %p205 = scmp.le.s32.totalorder 1, %s12
      %p206 = scmp.lt.s32.totalorder %s12, 3
      %p207 = pnand %p205, %p206
      %p208 = pneg %p207
      // Predicated region
      $region37: #{tpu_custom_call.1} parent=5 // pred_check
        _
      $region38: #{tpu_custom_call.1} parent=5 // pred_check_branch
        %210 = sbr.rel (%p207) target = $region40
      $region39: #{tpu_custom_call.1} parent=5 // pred_region
        %s211 = ssub.s32 %s12, 1
        %p212 = scmp.lt.s32.totalorder %s21, 0
        %s213 = scalar_select %p212, %s21, 0
        %p214 = scmp.lt.s32.totalorder %s22, 1
        %s215 = scalar_select %p214, %s22, 1
        %s216 = smul.addr %s215, 32
        %s217 = smul.addr %s213, 64
        %s218 = sadd.s32 %s216, %s217
        %s219 = smul.addr %s218, 4
        %s220 = scalar_lea.vmem %s0, %s219
        %p221 = pneg %p52
        %p222 = pneg %p49
        %p223 = pneg %p73
        %p224 = pneg %p70
        %p225 = pneg %p94
        %p226 = pneg %p91
        %p227 = pneg %p115
        %p228 = pneg %p112
        %p229 = pneg %p136
        %p230 = pneg %p133
        %p231 = pneg %p162
        %p232 = pneg %p159
        %p233 = scmp.lt.s32.totalorder %s21, 0
        %s234 = scalar_select %p233, %s21, 0
        %p235 = scmp.lt.s32.totalorder %s22, 1
        %s236 = scalar_select %p235, %s22, 1
        %s237 = smul.addr %s236, 32
        %s238 = smul.addr %s234, 64
        %s239 = sadd.s32 %s237, %s238
        %s240 = smul.addr %s239, 4
        %s241 = scalar_lea.vmem %s0, %s240
        %p243 = scmp.eq.s32.totalorder %s22, 0
        // Predicated region
        $region41: #{tpu_custom_call.1} parent=39 // pred_check
          %p244 = pneg %p243
        $region42: #{tpu_custom_call.1} parent=39 // pred_check_branch
          %246 = sbr.rel (%p244) target = $region44
        $region43: #{tpu_custom_call.1} parent=39 // pred_region
          %247 = vst [vmem:[#allocation2] sm:$0xff] 0.0
          %248 = vst [vmem:[#allocation2 + $0x8] sm:$0xff] 0.0
        $region44: #{tpu_custom_call.1} parent=39 // pred_fallthru
          _
        %v249 = vld [vmem:[%s241] sm:$0xf]
        %v250 = vld [vmem:[%s241 + $0x4] sm:$0xf]
        %v251 = vld [vmem:[%s241 + $0x8] sm:$0xf]
        %v252 = vld [vmem:[%s241 + $0xc] sm:$0xf]
        %v253 = vld [vmem:[%s241 + $0x10] sm:$0xf]
        %v254 = vld [vmem:[%s241 + $0x14] sm:$0xf]
        %v255 = vld [vmem:[%s241 + $0x18] sm:$0xf]
        %v256 = vld [vmem:[%s241 + $0x1c] sm:$0xf]
        %v257 = vld [vmem:[%s241 + $0x20] sm:$0xf]
        %v258 = vld [vmem:[%s241 + $0x24] sm:$0xf]
        %v259 = vld [vmem:[%s241 + $0x28] sm:$0xf]
        %v260 = vld [vmem:[%s241 + $0x2c] sm:$0xf]
        %v261 = vld [vmem:[%s241 + $0x30] sm:$0xf]
        %v262 = vld [vmem:[%s241 + $0x34] sm:$0xf]
        %v263 = vld [vmem:[%s241 + $0x38] sm:$0xf]
        %v264 = vld [vmem:[%s241 + $0x3c] sm:$0xf]
        %v265 = vld [vmem:[%s241 + $0x40] sm:$0xf]
        %v266 = vld [vmem:[%s241 + $0x44] sm:$0xf]
        %v267 = vld [vmem:[%s241 + $0x48] sm:$0xf]
        %v268 = vld [vmem:[%s241 + $0x4c] sm:$0xf]
        %v269 = vld [vmem:[%s241 + $0x50] sm:$0xf]
        %v270 = vld [vmem:[%s241 + $0x54] sm:$0xf]
        %v271 = vld [vmem:[%s241 + $0x58] sm:$0xf]
        %v272 = vld [vmem:[%s241 + $0x5c] sm:$0xf]
        %v273 = vld [vmem:[%s241 + $0x60] sm:$0xf]
        %v274 = vld [vmem:[%s241 + $0x64] sm:$0xf]
        %v275 = vld [vmem:[%s241 + $0x68] sm:$0xf]
        %v276 = vld [vmem:[%s241 + $0x6c] sm:$0xf]
        %v277 = vld [vmem:[%s241 + $0x70] sm:$0xf]
        %v278 = vld [vmem:[%s241 + $0x74] sm:$0xf]
        %v279 = vld [vmem:[%s241 + $0x78] sm:$0xf]
        %v280 = vld [vmem:[%s241 + $0x7c] sm:$0xf]
        %v281 = vld [vmem:[%s1] sm:$0xff]
        %v282 = vld [vmem:[%s1 + $0x8] sm:$0xff]
        %v283 = vld [vmem:[%s1 + $0x10] sm:$0xff]
        %v284 = vld [vmem:[%s1 + $0x18] sm:$0xff]
        %v317 = vunpack.c.l.b16 %v249
        %v318 = vunpack.c.l.b16 %v250
        %v319 = vunpack.c.l.b16 %v251
        %v320 = vunpack.c.l.b16 %v252
        %v321 = vunpack.c.l.b16 %v253
        %v322 = vunpack.c.l.b16 %v254
        %v323 = vunpack.c.l.b16 %v255
        %v324 = vunpack.c.l.b16 %v256
        %v325 = vunpack.c.l.b16 %v257
        %v326 = vunpack.c.l.b16 %v258
        %v327 = vunpack.c.l.b16 %v259
        %v328 = vunpack.c.l.b16 %v260
        %v329 = vunpack.c.l.b16 %v261
        %v330 = vunpack.c.l.b16 %v262
        %v331 = vunpack.c.l.b16 %v263
        %v332 = vunpack.c.l.b16 %v264
        %v333 = vunpack.c.l.b16 %v265
        %v334 = vunpack.c.l.b16 %v266
        %v335 = vunpack.c.l.b16 %v267
        %v336 = vunpack.c.l.b16 %v268
        %v337 = vunpack.c.l.b16 %v269
        %v338 = vunpack.c.l.b16 %v270
        %v339 = vunpack.c.l.b16 %v271
        %v340 = vunpack.c.l.b16 %v272
        %v341 = vunpack.c.l.b16 %v273
        %v342 = vunpack.c.l.b16 %v274
        %v343 = vunpack.c.l.b16 %v275
        %v344 = vunpack.c.l.b16 %v276
        %v345 = vunpack.c.l.b16 %v277
        %v346 = vunpack.c.l.b16 %v278
        %v347 = vunpack.c.l.b16 %v279
        %v348 = vunpack.c.l.b16 %v280
        %v349 = vpack.c.b16 %v318, %v317
        %v350 = vpack.c.b16 %v320, %v319
        %v351 = vpack.c.b16 %v322, %v321
        %v352 = vpack.c.b16 %v324, %v323
        %v353 = vpack.c.b16 %v326, %v325
        %v354 = vpack.c.b16 %v328, %v327
        %v355 = vpack.c.b16 %v330, %v329
        %v356 = vpack.c.b16 %v332, %v331
        %v357 = vpack.c.b16 %v334, %v333
        %v358 = vpack.c.b16 %v336, %v335
        %v359 = vpack.c.b16 %v338, %v337
        %v360 = vpack.c.b16 %v340, %v339
        %v361 = vpack.c.b16 %v342, %v341
        %v362 = vpack.c.b16 %v344, %v343
        %v363 = vpack.c.b16 %v346, %v345
        %v364 = vpack.c.b16 %v348, %v347
        %v369 = vunpack.c.l.b16 %v281
        %v370 = vunpack.c.h.b16 %v281
        %v371 = vunpack.c.l.b16 %v282
        %v372 = vunpack.c.h.b16 %v282
        %v373 = vunpack.c.l.b16 %v283
        %v374 = vunpack.c.h.b16 %v283
        %v375 = vunpack.c.l.b16 %v284
        %v376 = vunpack.c.h.b16 %v284
        %v377 = vpack.c.b16 %v371, %v369
        %v378 = vpack.c.b16 %v372, %v370
        %v379 = vpack.c.b16 %v375, %v373
        %v380 = vpack.c.b16 %v376, %v374
        %vm385 = vcmask 261120
        %v387 = vsel %vm385, %v349, 0
        %v390 = vsel %vm385, %v350, 0
        %v393 = vsel %vm385, %v351, 0
        %v396 = vsel %vm385, %v352, 0
        %v399 = vsel %vm385, %v353, 0
        %v402 = vsel %vm385, %v354, 0
        %v405 = vsel %vm385, %v355, 0
        %v408 = vsel %vm385, %v356, 0
        %v411 = vsel %vm385, %v357, 0
        %v414 = vsel %vm385, %v358, 0
        %v417 = vsel %vm385, %v359, 0
        %v420 = vsel %vm385, %v360, 0
        %v423 = vsel %vm385, %v361, 0
        %v426 = vsel %vm385, %v362, 0
        %v429 = vsel %vm385, %v363, 0
        %v432 = vsel %vm385, %v364, 0
        %434 = vmatprep.subr.bf16.mxu0 0
        %435 = vmatpush1.bf16.msra.mxu0 0
        %436 = vmatprep.subr.bf16.mxu0 0
        %437 = vmatpush1.bf16.msra.mxu0 0
        %438 = vmatprep.subr.bf16.mxu0 0
        %439 = vmatpush1.bf16.msra.mxu0 0
        %440 = vmatprep.subr.bf16.mxu0 0
        %441 = vmatpush1.bf16.msra.mxu0 0
        %442 = vmatprep.subr.bf16.mxu0 0
        %443 = vmatpush1.bf16.msra.mxu0 0
        %444 = vmatprep.subr.bf16.mxu0 0
        %445 = vmatpush1.bf16.msra.mxu0 0
        %446 = vmatprep.subr.bf16.mxu0 %v380
        %447 = vmatpush1.bf16.msra.mxu0 %v379
        %448 = vmatprep.subr.bf16.mxu0 %v378
        %449 = vmatpush1.bf16.msra.mxu0 %v377
        %450 = vmatprep.subr.bf16.mxu0 0
        %451 = vmatpush2.bf16.msra.mxu0 0
        %452 = vmatprep.subr.bf16.mxu0 0
        %453 = vmatpush2.bf16.msra.mxu0 0
        %454 = vmatprep.subr.bf16.mxu0 0
        %455 = vmatpush2.bf16.msra.mxu0 0
        %456 = vmatprep.subr.bf16.mxu0 0
        %457 = vmatpush2.bf16.msra.mxu0 0
        %458 = vmatprep.subr.bf16.mxu0 0
        %459 = vmatpush2.bf16.msra.mxu0 0
        %460 = vmatprep.subr.bf16.mxu0 0
        %461 = vmatpush2.bf16.msra.mxu0 0
        %462 = vmatprep.subr.bf16.mxu0 0
        %463 = vmatpush2.bf16.msra.mxu0 0
        %464 = vmatprep.subr.bf16.mxu0 0
        %465 = vmatpush2.bf16.msra.mxu0 0
        %466 = vmatprep.mubr.bf16.mxu0 0
        %467 = vmatmul.mubr.bf16.gmra.mxu0 %v387
        %v468 = vpop.f32.mrf.mxu0
        %v469 = vadd.f32 0.0, %v468
        %v470 = vpop.f32.mrf.mxu0
        %v471 = vadd.f32 0.0, %v470
        %v472 = vpop.f32.mrf.mxu0
        %v473 = vadd.f32 0.0, %v472
        %v474 = vpop.f32.mrf.mxu0
        %v475 = vadd.f32 0.0, %v474
        %476 = vmatprep.mubr.bf16.mxu0 0
        %477 = vmatmul.mubr.bf16.gmra.mxu0 %v390
        %v478 = vpop.f32.mrf.mxu0
        %v479 = vadd.f32 0.0, %v478
        %v480 = vpop.f32.mrf.mxu0
        %v481 = vadd.f32 0.0, %v480
        %v482 = vpop.f32.mrf.mxu0
        %v483 = vadd.f32 0.0, %v482
        %v484 = vpop.f32.mrf.mxu0
        %v485 = vadd.f32 0.0, %v484
        %486 = vmatprep.mubr.bf16.mxu0 0
        %487 = vmatmul.mubr.bf16.gmra.mxu0 %v393
        %v488 = vpop.f32.mrf.mxu0
        %v489 = vadd.f32 0.0, %v488
        %v490 = vpop.f32.mrf.mxu0
        %v491 = vadd.f32 0.0, %v490
        %v492 = vpop.f32.mrf.mxu0
        %v493 = vadd.f32 0.0, %v492
        %v494 = vpop.f32.mrf.mxu0
        %v495 = vadd.f32 0.0, %v494
        %496 = vmatprep.mubr.bf16.mxu0 0
        %497 = vmatmul.mubr.bf16.gmra.mxu0 %v396
        %v498 = vpop.f32.mrf.mxu0
        %v499 = vadd.f32 0.0, %v498
        %v500 = vpop.f32.mrf.mxu0
        %v501 = vadd.f32 0.0, %v500
        %v502 = vpop.f32.mrf.mxu0
        %v503 = vadd.f32 0.0, %v502
        %v504 = vpop.f32.mrf.mxu0
        %v505 = vadd.f32 0.0, %v504
        %506 = vmatprep.mubr.bf16.mxu0 0
        %507 = vmatmul.mubr.bf16.gmra.mxu0 %v399
        %v508 = vpop.f32.mrf.mxu0
        %v509 = vadd.f32 0.0, %v508
        %v510 = vpop.f32.mrf.mxu0
        %v511 = vadd.f32 0.0, %v510
        %v512 = vpop.f32.mrf.mxu0
        %v513 = vadd.f32 0.0, %v512
        %v514 = vpop.f32.mrf.mxu0
        %v515 = vadd.f32 0.0, %v514
        %516 = vmatprep.mubr.bf16.mxu0 0
        %517 = vmatmul.mubr.bf16.gmra.mxu0 %v402
        %v518 = vpop.f32.mrf.mxu0
        %v519 = vadd.f32 0.0, %v518
        %v520 = vpop.f32.mrf.mxu0
        %v521 = vadd.f32 0.0, %v520
        %v522 = vpop.f32.mrf.mxu0
        %v523 = vadd.f32 0.0, %v522
        %v524 = vpop.f32.mrf.mxu0
        %v525 = vadd.f32 0.0, %v524
        %526 = vmatprep.mubr.bf16.mxu0 0
        %527 = vmatmul.mubr.bf16.gmra.mxu0 %v405
        %v528 = vpop.f32.mrf.mxu0
        %v529 = vadd.f32 0.0, %v528
        %v530 = vpop.f32.mrf.mxu0
        %v531 = vadd.f32 0.0, %v530
        %v532 = vpop.f32.mrf.mxu0
        %v533 = vadd.f32 0.0, %v532
        %v534 = vpop.f32.mrf.mxu0
        %v535 = vadd.f32 0.0, %v534
        %536 = vmatprep.mubr.bf16.mxu0 0
        %537 = vmatmul.mubr.bf16.gmra.mxu0 %v408
        %v538 = vpop.f32.mrf.mxu0
        %v539 = vadd.f32 0.0, %v538
        %v540 = vpop.f32.mrf.mxu0
        %v541 = vadd.f32 0.0, %v540
        %v542 = vpop.f32.mrf.mxu0
        %v543 = vadd.f32 0.0, %v542
        %v544 = vpop.f32.mrf.mxu0
        %v545 = vadd.f32 0.0, %v544
        %546 = vmatprep.mubr.bf16.mxu0 0
        %547 = vmatmul.mubr.bf16.gmra.mxu0 %v411
        %v548 = vpop.f32.mrf.mxu0
        %v549 = vadd.f32 0.0, %v548
        %v550 = vpop.f32.mrf.mxu0
        %v551 = vadd.f32 0.0, %v550
        %v552 = vpop.f32.mrf.mxu0
        %v553 = vadd.f32 0.0, %v552
        %v554 = vpop.f32.mrf.mxu0
        %v555 = vadd.f32 0.0, %v554
        %556 = vmatprep.mubr.bf16.mxu0 0
        %557 = vmatmul.mubr.bf16.gmra.mxu0 %v414
        %v558 = vpop.f32.mrf.mxu0
        %v559 = vadd.f32 0.0, %v558
        %v560 = vpop.f32.mrf.mxu0
        %v561 = vadd.f32 0.0, %v560
        %v562 = vpop.f32.mrf.mxu0
        %v563 = vadd.f32 0.0, %v562
        %v564 = vpop.f32.mrf.mxu0
        %v565 = vadd.f32 0.0, %v564
        %566 = vmatprep.mubr.bf16.mxu0 0
        %567 = vmatmul.mubr.bf16.gmra.mxu0 %v417
        %v568 = vpop.f32.mrf.mxu0
        %v569 = vadd.f32 0.0, %v568
        %v570 = vpop.f32.mrf.mxu0
        %v571 = vadd.f32 0.0, %v570
        %v572 = vpop.f32.mrf.mxu0
        %v573 = vadd.f32 0.0, %v572
        %v574 = vpop.f32.mrf.mxu0
        %v575 = vadd.f32 0.0, %v574
        %576 = vmatprep.mubr.bf16.mxu0 0
        %577 = vmatmul.mubr.bf16.gmra.mxu0 %v420
        %v578 = vpop.f32.mrf.mxu0
        %v579 = vadd.f32 0.0, %v578
        %v580 = vpop.f32.mrf.mxu0
        %v581 = vadd.f32 0.0, %v580
        %v582 = vpop.f32.mrf.mxu0
        %v583 = vadd.f32 0.0, %v582
        %v584 = vpop.f32.mrf.mxu0
        %v585 = vadd.f32 0.0, %v584
        %586 = vmatprep.mubr.bf16.mxu0 0
        %587 = vmatmul.mubr.bf16.gmra.mxu0 %v423
        %v588 = vpop.f32.mrf.mxu0
        %v589 = vadd.f32 0.0, %v588
        %v590 = vpop.f32.mrf.mxu0
        %v591 = vadd.f32 0.0, %v590
        %v592 = vpop.f32.mrf.mxu0
        %v593 = vadd.f32 0.0, %v592
        %v594 = vpop.f32.mrf.mxu0
        %v595 = vadd.f32 0.0, %v594
        %596 = vmatprep.mubr.bf16.mxu0 0
        %597 = vmatmul.mubr.bf16.gmra.mxu0 %v426
        %v598 = vpop.f32.mrf.mxu0
        %v599 = vadd.f32 0.0, %v598
        %v600 = vpop.f32.mrf.mxu0
        %v601 = vadd.f32 0.0, %v600
        %v602 = vpop.f32.mrf.mxu0
        %v603 = vadd.f32 0.0, %v602
        %v604 = vpop.f32.mrf.mxu0
        %v605 = vadd.f32 0.0, %v604
        %606 = vmatprep.mubr.bf16.mxu0 0
        %607 = vmatmul.mubr.bf16.gmra.mxu0 %v429
        %v608 = vpop.f32.mrf.mxu0
        %v609 = vadd.f32 0.0, %v608
        %v610 = vpop.f32.mrf.mxu0
        %v611 = vadd.f32 0.0, %v610
        %v612 = vpop.f32.mrf.mxu0
        %v613 = vadd.f32 0.0, %v612
        %v614 = vpop.f32.mrf.mxu0
        %v615 = vadd.f32 0.0, %v614
        %616 = vmatprep.mubr.bf16.mxu0 0
        %617 = vmatmul.mubr.bf16.gmra.mxu0 %v432
        %v618 = vpop.f32.mrf.mxu0
        %v619 = vadd.f32 0.0, %v618
        %v620 = vpop.f32.mrf.mxu0
        %v621 = vadd.f32 0.0, %v620
        %v622 = vpop.f32.mrf.mxu0
        %v623 = vadd.f32 0.0, %v622
        %v624 = vpop.f32.mrf.mxu0
        %v625 = vadd.f32 0.0, %v624
        %626 = vdwg.mxu0
        %v627 = vpack.c.bf16 %v473, %v469
        %v628 = vpack.c.bf16 %v475, %v471
        %v629 = vpack.c.bf16 %v483, %v479
        %v630 = vpack.c.bf16 %v485, %v481
        %v631 = vpack.c.bf16 %v493, %v489
        %v632 = vpack.c.bf16 %v495, %v491
        %v633 = vpack.c.bf16 %v503, %v499
        %v634 = vpack.c.bf16 %v505, %v501
        %v635 = vpack.c.bf16 %v513, %v509
        %v636 = vpack.c.bf16 %v515, %v511
        %v637 = vpack.c.bf16 %v523, %v519
        %v638 = vpack.c.bf16 %v525, %v521
        %v639 = vpack.c.bf16 %v533, %v529
        %v640 = vpack.c.bf16 %v535, %v531
        %v641 = vpack.c.bf16 %v543, %v539
        %v642 = vpack.c.bf16 %v545, %v541
        %v643 = vpack.c.bf16 %v553, %v549
        %v644 = vpack.c.bf16 %v555, %v551
        %v645 = vpack.c.bf16 %v563, %v559
        %v646 = vpack.c.bf16 %v565, %v561
        %v647 = vpack.c.bf16 %v573, %v569
        %v648 = vpack.c.bf16 %v575, %v571
        %v649 = vpack.c.bf16 %v583, %v579
        %v650 = vpack.c.bf16 %v585, %v581
        %v651 = vpack.c.bf16 %v593, %v589
        %v652 = vpack.c.bf16 %v595, %v591
        %v653 = vpack.c.bf16 %v603, %v599
        %v654 = vpack.c.bf16 %v605, %v601
        %v655 = vpack.c.bf16 %v613, %v609
        %v656 = vpack.c.bf16 %v615, %v611
        %v657 = vpack.c.bf16 %v623, %v619
        %v658 = vpack.c.bf16 %v625, %v621
        %v659 = vld [vmem:[%s2] sm:$0xf]
        %v660 = vld [vmem:[%s2 + $0x4] sm:$0xf]
        %v661 = vld [vmem:[%s2 + $0x8] sm:$0xf]
        %v662 = vld [vmem:[%s2 + $0xc] sm:$0xf]
        %v663 = vld [vmem:[%s2 + $0x10] sm:$0xf]
        %v664 = vld [vmem:[%s2 + $0x14] sm:$0xf]
        %v665 = vld [vmem:[%s2 + $0x18] sm:$0xf]
        %v666 = vld [vmem:[%s2 + $0x1c] sm:$0xf]
        %v667 = vld [vmem:[%s2 + $0x20] sm:$0xf]
        %v668 = vld [vmem:[%s2 + $0x24] sm:$0xf]
        %v669 = vld [vmem:[%s2 + $0x28] sm:$0xf]
        %v670 = vld [vmem:[%s2 + $0x2c] sm:$0xf]
        %v671 = vld [vmem:[%s2 + $0x30] sm:$0xf]
        %v672 = vld [vmem:[%s2 + $0x34] sm:$0xf]
        %v673 = vld [vmem:[%s2 + $0x38] sm:$0xf]
        %v674 = vld [vmem:[%s2 + $0x3c] sm:$0xf]
        %v675 = vld [vmem:[%s2 + $0x40] sm:$0xf]
        %v676 = vld [vmem:[%s2 + $0x44] sm:$0xf]
        %v677 = vld [vmem:[%s2 + $0x48] sm:$0xf]
        %v678 = vld [vmem:[%s2 + $0x4c] sm:$0xf]
        %v679 = vld [vmem:[%s2 + $0x50] sm:$0xf]
        %v680 = vld [vmem:[%s2 + $0x54] sm:$0xf]
        %v681 = vld [vmem:[%s2 + $0x58] sm:$0xf]
        %v682 = vld [vmem:[%s2 + $0x5c] sm:$0xf]
        %v683 = vld [vmem:[%s2 + $0x60] sm:$0xf]
        %v684 = vld [vmem:[%s2 + $0x64] sm:$0xf]
        %v685 = vld [vmem:[%s2 + $0x68] sm:$0xf]
        %v686 = vld [vmem:[%s2 + $0x6c] sm:$0xf]
        %v687 = vld [vmem:[%s2 + $0x70] sm:$0xf]
        %v688 = vld [vmem:[%s2 + $0x74] sm:$0xf]
        %v689 = vld [vmem:[%s2 + $0x78] sm:$0xf]
        %v690 = vld [vmem:[%s2 + $0x7c] sm:$0xf]
        %v691 = vld [vmem:[%s3] sm:$0xf]
        %v692 = vld [vmem:[%s3 + $0x4] sm:$0xf]
        %v693 = vld [vmem:[%s3 + $0x8] sm:$0xf]
        %v694 = vld [vmem:[%s3 + $0xc] sm:$0xf]
        %v695 = vld [vmem:[%s3 + $0x10] sm:$0xf]
        %v696 = vld [vmem:[%s3 + $0x14] sm:$0xf]
        %v697 = vld [vmem:[%s3 + $0x18] sm:$0xf]
        %v698 = vld [vmem:[%s3 + $0x1c] sm:$0xf]
        %v699 = vld [vmem:[%s3 + $0x20] sm:$0xf]
        %v700 = vld [vmem:[%s3 + $0x24] sm:$0xf]
        %v701 = vld [vmem:[%s3 + $0x28] sm:$0xf]
        %v702 = vld [vmem:[%s3 + $0x2c] sm:$0xf]
        %v703 = vld [vmem:[%s3 + $0x30] sm:$0xf]
        %v704 = vld [vmem:[%s3 + $0x34] sm:$0xf]
        %v705 = vld [vmem:[%s3 + $0x38] sm:$0xf]
        %v706 = vld [vmem:[%s3 + $0x3c] sm:$0xf]
        %v707 = vld [vmem:[%s3 + $0x40] sm:$0xf]
        %v708 = vld [vmem:[%s3 + $0x44] sm:$0xf]
        %v709 = vld [vmem:[%s3 + $0x48] sm:$0xf]
        %v710 = vld [vmem:[%s3 + $0x4c] sm:$0xf]
        %v711 = vld [vmem:[%s3 + $0x50] sm:$0xf]
        %v712 = vld [vmem:[%s3 + $0x54] sm:$0xf]
        %v713 = vld [vmem:[%s3 + $0x58] sm:$0xf]
        %v714 = vld [vmem:[%s3 + $0x5c] sm:$0xf]
        %v715 = vld [vmem:[%s3 + $0x60] sm:$0xf]
        %v716 = vld [vmem:[%s3 + $0x64] sm:$0xf]
        %v717 = vld [vmem:[%s3 + $0x68] sm:$0xf]
        %v718 = vld [vmem:[%s3 + $0x6c] sm:$0xf]
        %v719 = vld [vmem:[%s3 + $0x70] sm:$0xf]
        %v720 = vld [vmem:[%s3 + $0x74] sm:$0xf]
        %v721 = vld [vmem:[%s3 + $0x78] sm:$0xf]
        %v722 = vld [vmem:[%s3 + $0x7c] sm:$0xf]
        %v755 = vunpack.c.l.b16 %v691
        %v756 = vunpack.c.l.b16 %v692
        %v757 = vunpack.c.l.b16 %v693
        %v758 = vunpack.c.l.b16 %v694
        %v759 = vunpack.c.l.b16 %v695
        %v760 = vunpack.c.l.b16 %v696
        %v761 = vunpack.c.l.b16 %v697
        %v762 = vunpack.c.l.b16 %v698
        %v763 = vunpack.c.l.b16 %v699
        %v764 = vunpack.c.l.b16 %v700
        %v765 = vunpack.c.l.b16 %v701
        %v766 = vunpack.c.l.b16 %v702
        %v767 = vunpack.c.l.b16 %v703
        %v768 = vunpack.c.l.b16 %v704
        %v769 = vunpack.c.l.b16 %v705
        %v770 = vunpack.c.l.b16 %v706
        %v771 = vunpack.c.l.b16 %v707
        %v772 = vunpack.c.l.b16 %v708
        %v773 = vunpack.c.l.b16 %v709
        %v774 = vunpack.c.l.b16 %v710
        %v775 = vunpack.c.l.b16 %v711
        %v776 = vunpack.c.l.b16 %v712
        %v777 = vunpack.c.l.b16 %v713
        %v778 = vunpack.c.l.b16 %v714
        %v779 = vunpack.c.l.b16 %v715
        %v780 = vunpack.c.l.b16 %v716
        %v781 = vunpack.c.l.b16 %v717
        %v782 = vunpack.c.l.b16 %v718
        %v783 = vunpack.c.l.b16 %v719
        %v784 = vunpack.c.l.b16 %v720
        %v785 = vunpack.c.l.b16 %v721
        %v786 = vunpack.c.l.b16 %v722
        %v787 = vpack.c.b16 %v756, %v755
        %v788 = vpack.c.b16 %v758, %v757
        %v789 = vpack.c.b16 %v760, %v759
        %v790 = vpack.c.b16 %v762, %v761
        %v791 = vpack.c.b16 %v764, %v763
        %v792 = vpack.c.b16 %v766, %v765
        %v793 = vpack.c.b16 %v768, %v767
        %v794 = vpack.c.b16 %v770, %v769
        %v795 = vpack.c.b16 %v772, %v771
        %v796 = vpack.c.b16 %v774, %v773
        %v797 = vpack.c.b16 %v776, %v775
        %v798 = vpack.c.b16 %v778, %v777
        %v799 = vpack.c.b16 %v780, %v779
        %v800 = vpack.c.b16 %v782, %v781
        %v801 = vpack.c.b16 %v784, %v783
        %v802 = vpack.c.b16 %v786, %v785
        %819 = vmatprep.subr.bf16.mxu0 0
        %820 = vmatpush1.bf16.msra.mxu0 %v794
        %821 = vmatprep.subr.bf16.mxu0 0
        %822 = vmatpush1.bf16.msra.mxu0 %v793
        %823 = vmatprep.subr.bf16.mxu0 0
        %824 = vmatpush1.bf16.msra.mxu0 %v792
        %825 = vmatprep.subr.bf16.mxu0 0
        %826 = vmatpush1.bf16.msra.mxu0 %v791
        %827 = vmatprep.subr.bf16.mxu0 0
        %828 = vmatpush1.bf16.msra.mxu0 %v790
        %829 = vmatprep.subr.bf16.mxu0 0
        %830 = vmatpush1.bf16.msra.mxu0 %v789
        %831 = vmatprep.subr.bf16.mxu0 0
        %832 = vmatpush1.bf16.msra.mxu0 %v788
        %833 = vmatprep.subr.bf16.mxu0 0
        %834 = vmatpush1.bf16.msra.mxu0 %v787
        %835 = vmatprep.subr.bf16.mxu0 0
        %836 = vmatpush2.bf16.msra.mxu0 %v802
        %837 = vmatprep.subr.bf16.mxu0 0
        %838 = vmatpush2.bf16.msra.mxu0 %v801
        %839 = vmatprep.subr.bf16.mxu0 0
        %840 = vmatpush2.bf16.msra.mxu0 %v800
        %841 = vmatprep.subr.bf16.mxu0 0
        %842 = vmatpush2.bf16.msra.mxu0 %v799
        %843 = vmatprep.subr.bf16.mxu0 0
        %844 = vmatpush2.bf16.msra.mxu0 %v798
        %845 = vmatprep.subr.bf16.mxu0 0
        %846 = vmatpush2.bf16.msra.mxu0 %v797
        %847 = vmatprep.subr.bf16.mxu0 0
        %848 = vmatpush2.bf16.msra.mxu0 %v796
        %849 = vmatprep.subr.bf16.mxu0 0
        %850 = vmatpush2.bf16.msra.mxu0 %v795
        %851 = vmatprep.mubr.bf16.mxu0 %v628
        %852 = vmatmul.mubr.bf16.gmra.mxu0 %v627
        %v853 = vpop.f32.mrf.mxu0
        %v854 = vadd.f32 0.0, %v853
        %v855 = vpop.f32.mrf.mxu0
        %v856 = vpop.f32.mrf.mxu0
        %v857 = vadd.f32 0.0, %v856
        %v858 = vpop.f32.mrf.mxu0
        %859 = vmatprep.mubr.bf16.mxu0 %v630
        %860 = vmatmul.mubr.bf16.gmra.mxu0 %v629
        %v861 = vpop.f32.mrf.mxu0
        %v862 = vadd.f32 0.0, %v861
        %v863 = vpop.f32.mrf.mxu0
        %v864 = vpop.f32.mrf.mxu0
        %v865 = vadd.f32 0.0, %v864
        %v866 = vpop.f32.mrf.mxu0
        %867 = vmatprep.mubr.bf16.mxu0 %v632
        %868 = vmatmul.mubr.bf16.gmra.mxu0 %v631
        %v869 = vpop.f32.mrf.mxu0
        %v870 = vadd.f32 0.0, %v869
        %v871 = vpop.f32.mrf.mxu0
        %v872 = vpop.f32.mrf.mxu0
        %v873 = vadd.f32 0.0, %v872
        %v874 = vpop.f32.mrf.mxu0
        %875 = vmatprep.mubr.bf16.mxu0 %v634
        %876 = vmatmul.mubr.bf16.gmra.mxu0 %v633
        %v877 = vpop.f32.mrf.mxu0
        %v878 = vadd.f32 0.0, %v877
        %v879 = vpop.f32.mrf.mxu0
        %v880 = vpop.f32.mrf.mxu0
        %v881 = vadd.f32 0.0, %v880
        %v882 = vpop.f32.mrf.mxu0
        %883 = vmatprep.mubr.bf16.mxu0 %v636
        %884 = vmatmul.mubr.bf16.gmra.mxu0 %v635
        %v885 = vpop.f32.mrf.mxu0
        %v886 = vadd.f32 0.0, %v885
        %v887 = vpop.f32.mrf.mxu0
        %v888 = vpop.f32.mrf.mxu0
        %v889 = vadd.f32 0.0, %v888
        %v890 = vpop.f32.mrf.mxu0
        %891 = vmatprep.mubr.bf16.mxu0 %v638
        %892 = vmatmul.mubr.bf16.gmra.mxu0 %v637
        %v893 = vpop.f32.mrf.mxu0
        %v894 = vadd.f32 0.0, %v893
        %v895 = vpop.f32.mrf.mxu0
        %v896 = vpop.f32.mrf.mxu0
        %v897 = vadd.f32 0.0, %v896
        %v898 = vpop.f32.mrf.mxu0
        %899 = vmatprep.mubr.bf16.mxu0 %v640
        %900 = vmatmul.mubr.bf16.gmra.mxu0 %v639
        %v901 = vpop.f32.mrf.mxu0
        %v902 = vadd.f32 0.0, %v901
        %v903 = vpop.f32.mrf.mxu0
        %v904 = vpop.f32.mrf.mxu0
        %v905 = vadd.f32 0.0, %v904
        %v906 = vpop.f32.mrf.mxu0
        %907 = vmatprep.mubr.bf16.mxu0 %v642
        %908 = vmatmul.mubr.bf16.gmra.mxu0 %v641
        %v909 = vpop.f32.mrf.mxu0
        %v910 = vadd.f32 0.0, %v909
        %v911 = vpop.f32.mrf.mxu0
        %v912 = vpop.f32.mrf.mxu0
        %v913 = vadd.f32 0.0, %v912
        %v914 = vpop.f32.mrf.mxu0
        %915 = vmatprep.mubr.bf16.mxu0 %v644
        %916 = vmatmul.mubr.bf16.gmra.mxu0 %v643
        %v917 = vpop.f32.mrf.mxu0
        %v918 = vadd.f32 0.0, %v917
        %v919 = vpop.f32.mrf.mxu0
        %v920 = vpop.f32.mrf.mxu0
        %v921 = vadd.f32 0.0, %v920
        %v922 = vpop.f32.mrf.mxu0
        %923 = vmatprep.mubr.bf16.mxu0 %v646
        %924 = vmatmul.mubr.bf16.gmra.mxu0 %v645
        %v925 = vpop.f32.mrf.mxu0
        %v926 = vadd.f32 0.0, %v925
        %v927 = vpop.f32.mrf.mxu0
        %v928 = vpop.f32.mrf.mxu0
        %v929 = vadd.f32 0.0, %v928
        %v930 = vpop.f32.mrf.mxu0
        %931 = vmatprep.mubr.bf16.mxu0 %v648
        %932 = vmatmul.mubr.bf16.gmra.mxu0 %v647
        %v933 = vpop.f32.mrf.mxu0
        %v934 = vadd.f32 0.0, %v933
        %v935 = vpop.f32.mrf.mxu0
        %v936 = vpop.f32.mrf.mxu0
        %v937 = vadd.f32 0.0, %v936
        %v938 = vpop.f32.mrf.mxu0
        %939 = vmatprep.mubr.bf16.mxu0 %v650
        %940 = vmatmul.mubr.bf16.gmra.mxu0 %v649
        %v941 = vpop.f32.mrf.mxu0
        %v942 = vadd.f32 0.0, %v941
        %v943 = vpop.f32.mrf.mxu0
        %v944 = vpop.f32.mrf.mxu0
        %v945 = vadd.f32 0.0, %v944
        %v946 = vpop.f32.mrf.mxu0
        %947 = vmatprep.mubr.bf16.mxu0 %v652
        %948 = vmatmul.mubr.bf16.gmra.mxu0 %v651
        %v949 = vpop.f32.mrf.mxu0
        %v950 = vadd.f32 0.0, %v949
        %v951 = vpop.f32.mrf.mxu0
        %v952 = vpop.f32.mrf.mxu0
        %v953 = vadd.f32 0.0, %v952
        %v954 = vpop.f32.mrf.mxu0
        %955 = vmatprep.mubr.bf16.mxu0 %v654
        %956 = vmatmul.mubr.bf16.gmra.mxu0 %v653
        %v957 = vpop.f32.mrf.mxu0
        %v958 = vadd.f32 0.0, %v957
        %v959 = vpop.f32.mrf.mxu0
        %v960 = vpop.f32.mrf.mxu0
        %v961 = vadd.f32 0.0, %v960
        %v962 = vpop.f32.mrf.mxu0
        %963 = vmatprep.mubr.bf16.mxu0 %v656
        %964 = vmatmul.mubr.bf16.gmra.mxu0 %v655
        %v965 = vpop.f32.mrf.mxu0
        %v966 = vadd.f32 0.0, %v965
        %v967 = vpop.f32.mrf.mxu0
        %v968 = vpop.f32.mrf.mxu0
        %v969 = vadd.f32 0.0, %v968
        %v970 = vpop.f32.mrf.mxu0
        %971 = vmatprep.mubr.bf16.mxu0 %v658
        %972 = vmatmul.mubr.bf16.gmra.mxu0 %v657
        %v973 = vpop.f32.mrf.mxu0
        %v974 = vadd.f32 0.0, %v973
        %v975 = vpop.f32.mrf.mxu0
        %v976 = vpop.f32.mrf.mxu0
        %v977 = vadd.f32 0.0, %v976
        %v978 = vpop.f32.mrf.mxu0
        %979 = vdwg.mxu0
        %v1012 = vunpack.c.l.b16 %v659
        %v1013 = vunpack.c.l.b16 %v660
        %v1014 = vunpack.c.l.b16 %v661
        %v1015 = vunpack.c.l.b16 %v662
        %v1016 = vunpack.c.l.b16 %v663
        %v1017 = vunpack.c.l.b16 %v664
        %v1018 = vunpack.c.l.b16 %v665
        %v1019 = vunpack.c.l.b16 %v666
        %v1020 = vunpack.c.l.b16 %v667
        %v1021 = vunpack.c.l.b16 %v668
        %v1022 = vunpack.c.l.b16 %v669
        %v1023 = vunpack.c.l.b16 %v670
        %v1024 = vunpack.c.l.b16 %v671
        %v1025 = vunpack.c.l.b16 %v672
        %v1026 = vunpack.c.l.b16 %v673
        %v1027 = vunpack.c.l.b16 %v674
        %v1028 = vunpack.c.l.b16 %v675
        %v1029 = vunpack.c.l.b16 %v676
        %v1030 = vunpack.c.l.b16 %v677
        %v1031 = vunpack.c.l.b16 %v678
        %v1032 = vunpack.c.l.b16 %v679
        %v1033 = vunpack.c.l.b16 %v680
        %v1034 = vunpack.c.l.b16 %v681
        %v1035 = vunpack.c.l.b16 %v682
        %v1036 = vunpack.c.l.b16 %v683
        %v1037 = vunpack.c.l.b16 %v684
        %v1038 = vunpack.c.l.b16 %v685
        %v1039 = vunpack.c.l.b16 %v686
        %v1040 = vunpack.c.l.b16 %v687
        %v1041 = vunpack.c.l.b16 %v688
        %v1042 = vunpack.c.l.b16 %v689
        %v1043 = vunpack.c.l.b16 %v690
        %v1044 = vpack.c.b16 %v1013, %v1012
        %v1045 = vpack.c.b16 %v1015, %v1014
        %v1046 = vpack.c.b16 %v1017, %v1016
        %v1047 = vpack.c.b16 %v1019, %v1018
        %v1048 = vpack.c.b16 %v1021, %v1020
        %v1049 = vpack.c.b16 %v1023, %v1022
        %v1050 = vpack.c.b16 %v1025, %v1024
        %v1051 = vpack.c.b16 %v1027, %v1026
        %v1052 = vpack.c.b16 %v1029, %v1028
        %v1053 = vpack.c.b16 %v1031, %v1030
        %v1054 = vpack.c.b16 %v1033, %v1032
        %v1055 = vpack.c.b16 %v1035, %v1034
        %v1056 = vpack.c.b16 %v1037, %v1036
        %v1057 = vpack.c.b16 %v1039, %v1038
        %v1058 = vpack.c.b16 %v1041, %v1040
        %v1059 = vpack.c.b16 %v1043, %v1042
        %1076 = vmatprep.subr.bf16.mxu0 0
        %1077 = vmatpush1.bf16.msra.mxu0 %v1051
        %1078 = vmatprep.subr.bf16.mxu0 0
        %1079 = vmatpush1.bf16.msra.mxu0 %v1050
        %1080 = vmatprep.subr.bf16.mxu0 0
        %1081 = vmatpush1.bf16.msra.mxu0 %v1049
        %1082 = vmatprep.subr.bf16.mxu0 0
        %1083 = vmatpush1.bf16.msra.mxu0 %v1048
        %1084 = vmatprep.subr.bf16.mxu0 0
        %1085 = vmatpush1.bf16.msra.mxu0 %v1047
        %1086 = vmatprep.subr.bf16.mxu0 0
        %1087 = vmatpush1.bf16.msra.mxu0 %v1046
        %1088 = vmatprep.subr.bf16.mxu0 0
        %1089 = vmatpush1.bf16.msra.mxu0 %v1045
        %1090 = vmatprep.subr.bf16.mxu0 0
        %1091 = vmatpush1.bf16.msra.mxu0 %v1044
        %1092 = vmatprep.subr.bf16.mxu0 0
        %1093 = vmatpush2.bf16.msra.mxu0 %v1059
        %1094 = vmatprep.subr.bf16.mxu0 0
        %1095 = vmatpush2.bf16.msra.mxu0 %v1058
        %1096 = vmatprep.subr.bf16.mxu0 0
        %1097 = vmatpush2.bf16.msra.mxu0 %v1057
        %1098 = vmatprep.subr.bf16.mxu0 0
        %1099 = vmatpush2.bf16.msra.mxu0 %v1056
        %1100 = vmatprep.subr.bf16.mxu0 0
        %1101 = vmatpush2.bf16.msra.mxu0 %v1055
        %1102 = vmatprep.subr.bf16.mxu0 0
        %1103 = vmatpush2.bf16.msra.mxu0 %v1054
        %1104 = vmatprep.subr.bf16.mxu0 0
        %1105 = vmatpush2.bf16.msra.mxu0 %v1053
        %1106 = vmatprep.subr.bf16.mxu0 0
        %1107 = vmatpush2.bf16.msra.mxu0 %v1052
        %1108 = vmatprep.mubr.bf16.mxu0 %v628
        %1109 = vmatmul.mubr.bf16.gmra.mxu0 %v627
        %v1110 = vpop.f32.mrf.mxu0
        %v1111 = vadd.f32 %v854, %v1110
        %v1112 = vpop.f32.mrf.mxu0
        %v1113 = vpop.f32.mrf.mxu0
        %v1114 = vadd.f32 %v857, %v1113
        %v1115 = vpop.f32.mrf.mxu0
        %1116 = vmatprep.mubr.bf16.mxu0 %v630
        %1117 = vmatmul.mubr.bf16.gmra.mxu0 %v629
        %v1118 = vpop.f32.mrf.mxu0
        %v1119 = vadd.f32 %v862, %v1118
        %v1120 = vpop.f32.mrf.mxu0
        %v1121 = vpop.f32.mrf.mxu0
        %v1122 = vadd.f32 %v865, %v1121
        %v1123 = vpop.f32.mrf.mxu0
        %1124 = vmatprep.mubr.bf16.mxu0 %v632
        %1125 = vmatmul.mubr.bf16.gmra.mxu0 %v631
        %v1126 = vpop.f32.mrf.mxu0
        %v1127 = vadd.f32 %v870, %v1126
        %v1128 = vpop.f32.mrf.mxu0
        %v1129 = vpop.f32.mrf.mxu0
        %v1130 = vadd.f32 %v873, %v1129
        %v1131 = vpop.f32.mrf.mxu0
        %1132 = vmatprep.mubr.bf16.mxu0 %v634
        %1133 = vmatmul.mubr.bf16.gmra.mxu0 %v633
        %v1134 = vpop.f32.mrf.mxu0
        %v1135 = vadd.f32 %v878, %v1134
        %v1136 = vpop.f32.mrf.mxu0
        %v1137 = vpop.f32.mrf.mxu0
        %v1138 = vadd.f32 %v881, %v1137
        %v1139 = vpop.f32.mrf.mxu0
        %1140 = vmatprep.mubr.bf16.mxu0 %v636
        %1141 = vmatmul.mubr.bf16.gmra.mxu0 %v635
        %v1142 = vpop.f32.mrf.mxu0
        %v1143 = vadd.f32 %v886, %v1142
        %v1144 = vpop.f32.mrf.mxu0
        %v1145 = vpop.f32.mrf.mxu0
        %v1146 = vadd.f32 %v889, %v1145
        %v1147 = vpop.f32.mrf.mxu0
        %1148 = vmatprep.mubr.bf16.mxu0 %v638
        %1149 = vmatmul.mubr.bf16.gmra.mxu0 %v637
        %v1150 = vpop.f32.mrf.mxu0
        %v1151 = vadd.f32 %v894, %v1150
        %v1152 = vpop.f32.mrf.mxu0
        %v1153 = vpop.f32.mrf.mxu0
        %v1154 = vadd.f32 %v897, %v1153
        %v1155 = vpop.f32.mrf.mxu0
        %1156 = vmatprep.mubr.bf16.mxu0 %v640
        %1157 = vmatmul.mubr.bf16.gmra.mxu0 %v639
        %v1158 = vpop.f32.mrf.mxu0
        %v1159 = vadd.f32 %v902, %v1158
        %v1160 = vpop.f32.mrf.mxu0
        %v1161 = vpop.f32.mrf.mxu0
        %v1162 = vadd.f32 %v905, %v1161
        %v1163 = vpop.f32.mrf.mxu0
        %1164 = vmatprep.mubr.bf16.mxu0 %v642
        %1165 = vmatmul.mubr.bf16.gmra.mxu0 %v641
        %v1166 = vpop.f32.mrf.mxu0
        %v1167 = vadd.f32 %v910, %v1166
        %v1168 = vpop.f32.mrf.mxu0
        %v1169 = vpop.f32.mrf.mxu0
        %v1170 = vadd.f32 %v913, %v1169
        %v1171 = vpop.f32.mrf.mxu0
        %1172 = vmatprep.mubr.bf16.mxu0 %v644
        %1173 = vmatmul.mubr.bf16.gmra.mxu0 %v643
        %v1174 = vpop.f32.mrf.mxu0
        %v1175 = vadd.f32 %v918, %v1174
        %v1176 = vpop.f32.mrf.mxu0
        %v1177 = vpop.f32.mrf.mxu0
        %v1178 = vadd.f32 %v921, %v1177
        %v1179 = vpop.f32.mrf.mxu0
        %1180 = vmatprep.mubr.bf16.mxu0 %v646
        %1181 = vmatmul.mubr.bf16.gmra.mxu0 %v645
        %v1182 = vpop.f32.mrf.mxu0
        %v1183 = vadd.f32 %v926, %v1182
        %v1184 = vpop.f32.mrf.mxu0
        %v1185 = vpop.f32.mrf.mxu0
        %v1186 = vadd.f32 %v929, %v1185
        %v1187 = vpop.f32.mrf.mxu0
        %1188 = vmatprep.mubr.bf16.mxu0 %v648
        %1189 = vmatmul.mubr.bf16.gmra.mxu0 %v647
        %v1190 = vpop.f32.mrf.mxu0
        %v1191 = vadd.f32 %v934, %v1190
        %v1192 = vpop.f32.mrf.mxu0
        %v1193 = vpop.f32.mrf.mxu0
        %v1194 = vadd.f32 %v937, %v1193
        %v1195 = vpop.f32.mrf.mxu0
        %1196 = vmatprep.mubr.bf16.mxu0 %v650
        %1197 = vmatmul.mubr.bf16.gmra.mxu0 %v649
        %v1198 = vpop.f32.mrf.mxu0
        %v1199 = vadd.f32 %v942, %v1198
        %v1200 = vpop.f32.mrf.mxu0
        %v1201 = vpop.f32.mrf.mxu0
        %v1202 = vadd.f32 %v945, %v1201
        %v1203 = vpop.f32.mrf.mxu0
        %1204 = vmatprep.mubr.bf16.mxu0 %v652
        %1205 = vmatmul.mubr.bf16.gmra.mxu0 %v651
        %v1206 = vpop.f32.mrf.mxu0
        %v1207 = vadd.f32 %v950, %v1206
        %v1208 = vpop.f32.mrf.mxu0
        %v1209 = vpop.f32.mrf.mxu0
        %v1210 = vadd.f32 %v953, %v1209
        %v1211 = vpop.f32.mrf.mxu0
        %1212 = vmatprep.mubr.bf16.mxu0 %v654
        %1213 = vmatmul.mubr.bf16.gmra.mxu0 %v653
        %v1214 = vpop.f32.mrf.mxu0
        %v1215 = vadd.f32 %v958, %v1214
        %v1216 = vpop.f32.mrf.mxu0
        %v1217 = vpop.f32.mrf.mxu0
        %v1218 = vadd.f32 %v961, %v1217
        %v1219 = vpop.f32.mrf.mxu0
        %1220 = vmatprep.mubr.bf16.mxu0 %v656
        %1221 = vmatmul.mubr.bf16.gmra.mxu0 %v655
        %v1222 = vpop.f32.mrf.mxu0
        %v1223 = vadd.f32 %v966, %v1222
        %v1224 = vpop.f32.mrf.mxu0
        %v1225 = vpop.f32.mrf.mxu0
        %v1226 = vadd.f32 %v969, %v1225
        %v1227 = vpop.f32.mrf.mxu0
        %1228 = vmatprep.mubr.bf16.mxu0 %v658
        %1229 = vmatmul.mubr.bf16.gmra.mxu0 %v657
        %v1230 = vpop.f32.mrf.mxu0
        %v1231 = vadd.f32 %v974, %v1230
        %v1232 = vpop.f32.mrf.mxu0
        %v1233 = vpop.f32.mrf.mxu0
        %v1234 = vadd.f32 %v977, %v1233
        %v1235 = vpop.f32.mrf.mxu0
        %1236 = vdwg.mxu0
        %v1237 = vld [vmem:[%s4] sm:$0x1]
        %v1239 = vlaneseq
        %v1240 = vshrl.u32 %v1239, 7
        %v1241 = vsub.s32 0, %v1240
        %v1242 = vrot.slane %v1237, %v1241
        %v1244 = vadd.f32 %v1111, %v1242
        %v1245 = vadd.f32 %v1114, %v1242
        %v1246 = vadd.f32 %v1119, %v1242
        %v1247 = vadd.f32 %v1122, %v1242
        %v1248 = vadd.f32 %v1127, %v1242
        %v1249 = vadd.f32 %v1130, %v1242
        %v1250 = vadd.f32 %v1135, %v1242
        %v1251 = vadd.f32 %v1138, %v1242
        %v1252 = vadd.f32 %v1143, %v1242
        %v1253 = vadd.f32 %v1146, %v1242
        %v1254 = vadd.f32 %v1151, %v1242
        %v1255 = vadd.f32 %v1154, %v1242
        %v1256 = vadd.f32 %v1159, %v1242
        %v1257 = vadd.f32 %v1162, %v1242
        %v1258 = vadd.f32 %v1167, %v1242
        %v1259 = vadd.f32 %v1170, %v1242
        %v1260 = vadd.f32 %v1175, %v1242
        %v1261 = vadd.f32 %v1178, %v1242
        %v1262 = vadd.f32 %v1183, %v1242
        %v1263 = vadd.f32 %v1186, %v1242
        %v1264 = vadd.f32 %v1191, %v1242
        %v1265 = vadd.f32 %v1194, %v1242
        %v1266 = vadd.f32 %v1199, %v1242
        %v1267 = vadd.f32 %v1202, %v1242
        %v1268 = vadd.f32 %v1207, %v1242
        %v1269 = vadd.f32 %v1210, %v1242
        %v1270 = vadd.f32 %v1215, %v1242
        %v1271 = vadd.f32 %v1218, %v1242
        %v1272 = vadd.f32 %v1223, %v1242
        %v1273 = vadd.f32 %v1226, %v1242
        %v1274 = vadd.f32 %v1231, %v1242
        %v1275 = vadd.f32 %v1234, %v1242
        %v1276 = vld [vmem:[#allocation2] sm:$0xff]
        %v1277 = vld [vmem:[#allocation2 + $0x8] sm:$0xff]
        %v1278 = vpack.c.bf16 %v1245, %v1244
        %v1279 = vpack.c.bf16 %v1247, %v1246
        %v1280 = vpack.c.bf16 %v1249, %v1248
        %v1281 = vpack.c.bf16 %v1251, %v1250
        %v1282 = vpack.c.bf16 %v1253, %v1252
        %v1283 = vpack.c.bf16 %v1255, %v1254
        %v1284 = vpack.c.bf16 %v1257, %v1256
        %v1285 = vpack.c.bf16 %v1259, %v1258
        %v1286 = vpack.c.bf16 %v1261, %v1260
        %v1287 = vpack.c.bf16 %v1263, %v1262
        %v1288 = vpack.c.bf16 %v1265, %v1264
        %v1289 = vpack.c.bf16 %v1267, %v1266
        %v1290 = vpack.c.bf16 %v1269, %v1268
        %v1291 = vpack.c.bf16 %v1271, %v1270
        %v1292 = vpack.c.bf16 %v1273, %v1272
        %v1293 = vpack.c.bf16 %v1275, %v1274
        %1294 = vxpose.xlu0.c.b16.start [1/8] %v1278, 128
        %1295 = vxpose.xlu0.c.b16.cont [2/8] %v1279, 128
        %1296 = vxpose.xlu0.c.b16.cont [3/8] %v1280, 128
        %1297 = vxpose.xlu0.c.b16.cont [4/8] %v1281, 128
        %1298 = vxpose.xlu0.c.b16.cont [5/8] %v1282, 128
        %1299 = vxpose.xlu0.c.b16.cont [6/8] %v1283, 128
        %1300 = vxpose.xlu0.c.b16.cont [7/8] %v1284, 128
        %1301 = vxpose.xlu0.c.b16.end [8/8] %v1285, 128
        %v1302 = vpop.trf.xlu0
        %v1303 = vpop.trf.xlu0
        %v1304 = vpop.trf.xlu0
        %v1305 = vpop.trf.xlu0
        %v1306 = vpop.trf.xlu0
        %v1307 = vpop.trf.xlu0
        %v1308 = vpop.trf.xlu0
        %v1309 = vpop.trf.xlu0
        %1310 = vxpose.xlu0.c.b16.start [1/8] %v1286, 128
        %1311 = vxpose.xlu0.c.b16.cont [2/8] %v1287, 128
        %1312 = vxpose.xlu0.c.b16.cont [3/8] %v1288, 128
        %1313 = vxpose.xlu0.c.b16.cont [4/8] %v1289, 128
        %1314 = vxpose.xlu0.c.b16.cont [5/8] %v1290, 128
        %1315 = vxpose.xlu0.c.b16.cont [6/8] %v1291, 128
        %1316 = vxpose.xlu0.c.b16.cont [7/8] %v1292, 128
        %1317 = vxpose.xlu0.c.b16.end [8/8] %v1293, 128
        %v1318 = vpop.trf.xlu0
        %v1319 = vpop.trf.xlu0
        %v1320 = vpop.trf.xlu0
        %v1321 = vpop.trf.xlu0
        %v1322 = vpop.trf.xlu0
        %v1323 = vpop.trf.xlu0
        %v1324 = vpop.trf.xlu0
        %v1325 = vpop.trf.xlu0
        %1326 = vmatprep.subr.bf16.mxu0 %v642
        %1327 = vmatpush1.bf16.msra.mxu0 %v641
        %1328 = vmatprep.subr.bf16.mxu0 %v640
        %1329 = vmatpush1.bf16.msra.mxu0 %v639
        %1330 = vmatprep.subr.bf16.mxu0 %v638
        %1331 = vmatpush1.bf16.msra.mxu0 %v637
        %1332 = vmatprep.subr.bf16.mxu0 %v636
        %1333 = vmatpush1.bf16.msra.mxu0 %v635
        %1334 = vmatprep.subr.bf16.mxu0 %v634
        %1335 = vmatpush1.bf16.msra.mxu0 %v633
        %1336 = vmatprep.subr.bf16.mxu0 %v632
        %1337 = vmatpush1.bf16.msra.mxu0 %v631
        %1338 = vmatprep.subr.bf16.mxu0 %v630
        %1339 = vmatpush1.bf16.msra.mxu0 %v629
        %1340 = vmatprep.subr.bf16.mxu0 %v628
        %1341 = vmatpush1.bf16.msra.mxu0 %v627
        %1342 = vmatprep.subr.bf16.mxu0 %v658
        %1343 = vmatpush2.bf16.msra.mxu0 %v657
        %1344 = vmatprep.subr.bf16.mxu0 %v656
        %1345 = vmatpush2.bf16.msra.mxu0 %v655
        %1346 = vmatprep.subr.bf16.mxu0 %v654
        %1347 = vmatpush2.bf16.msra.mxu0 %v653
        %1348 = vmatprep.subr.bf16.mxu0 %v652
        %1349 = vmatpush2.bf16.msra.mxu0 %v651
        %1350 = vmatprep.subr.bf16.mxu0 %v650
        %1351 = vmatpush2.bf16.msra.mxu0 %v649
        %1352 = vmatprep.subr.bf16.mxu0 %v648
        %1353 = vmatpush2.bf16.msra.mxu0 %v647
        %1354 = vmatprep.subr.bf16.mxu0 %v646
        %1355 = vmatpush2.bf16.msra.mxu0 %v645
        %1356 = vmatprep.subr.bf16.mxu0 %v644
        %1357 = vmatpush2.bf16.msra.mxu0 %v643
        %1358 = vmatprep.mubr.bf16.mxu0 %v1318
        %1359 = vmatmul.mubr.bf16.gmra.mxu0 %v1302
        %v1360 = vpop.f32.mrf.mxu0
        %v1361 = vadd.f32 0.0, %v1360
        %v1362 = vpop.f32.mrf.mxu0
        %v1363 = vadd.f32 0.0, %v1362
        %v1364 = vpop.f32.mrf.mxu0
        %v1365 = vpop.f32.mrf.mxu0
        %1366 = vdwg.mxu0
        %v1367 = vadd.f32 %v1276, %v1361
        %v1368 = vadd.f32 %v1277, %v1363
        %1369 = vst [vmem:[#allocation2] sm:$0xff] %v1367
        %1370 = vst [vmem:[#allocation2 + $0x8] sm:$0xff] %v1368
        // Predicated region
        $region45: #{tpu_custom_call.1} parent=39 // pred_check
          %p1371 = pneg %p159
        $region46: #{tpu_custom_call.1} parent=39 // pred_check_branch
          %1373 = sbr.rel (%p1371) target = $region48
        $region47: #{tpu_custom_call.1} parent=39 // pred_region
          %s1375 = ssub.s32 256, 256
          %1376 = vsyncadd [#allocation3], %s1375
          %s1377 = smul.addr %s21, 2
          %s1378 = smul.addr %s1377, 128
          %s1379 = scalar_lea.hbm %s5, %s1378
          %s1381 = sshll.u32 [#allocation2], 4
          %s1382 = int_to_ptr.vmem [resolvable:$true] %s1381
          %1384 = dma.vmem_to_hbm [thread:$0]  %s1382, 256, %s1379, [#allocation3]
        $region48: #{tpu_custom_call.1} parent=39 // pred_fallthru
          _
        // Predicated region
        $region49: #{tpu_custom_call.1} parent=39 // pred_check
          %p1385 = pneg %p159
        $region50: #{tpu_custom_call.1} parent=39 // pred_check_branch
          %1387 = sbr.rel (%p1385) target = $region52
        $region51: #{tpu_custom_call.1} parent=39 // pred_region
          %1388 = dma.done [#allocation3], 256
        $region52: #{tpu_custom_call.1} parent=39 // pred_fallthru
          _
      $region40: #{tpu_custom_call.1} parent=5 // pred_fallthru
        _
      %p1389 = scmp.le.s32.totalorder 2, %s12
      // Predicated region
      $region53: #{tpu_custom_call.1} parent=5 // pred_check
        %p1390 = pneg %p1389
      $region54: #{tpu_custom_call.1} parent=5 // pred_check_branch
        %1392 = sbr.rel (%p1390) target = $region56
      $region55: #{tpu_custom_call.1} parent=5 // pred_region
        %s1393 = ssub.s32 %s12, 2
      $region56: #{tpu_custom_call.1} parent=5 // pred_fallthru
        _
    $region6: #{tpu_custom_call.1} parent=1 // loop_footer
      %s16 = sadd.s32 1, %s12
    $region7: #{tpu_custom_call.1} parent=1 // loop_footer_branch
      %11 = sbr.rel target = $region3
    $region8: #{tpu_custom_call.1} parent=1 // loop_exit
      _
    %1394 = vsyncpa [#allocation3], 1
    %s1395 = scalar_lea.sflag [#allocation3], 1
    %1396 = vsyncpa %s1395, 1

</llo_original>
